<compile_context>
chip_gen: v7x
topology: tpu7x:2x2x1
jax: 0.10.0
libtpu: 0.0.40
codegen_flags: <defaults>
</compile_context>

<pallas_src>
import functools
import math

import jax
import jax.numpy as jnp
from jax.experimental import pallas as pl
from jax.experimental.pallas import tpu as pltpu


# ----------------------------------------------------------------------------- tiling utils

_LANE = 128      # lane (minor) tile granularity
_SUBLANE = 8     # sublane granularity


def _choose_tile(dim, preferred, multiple):
    """Largest tile <= preferred that is a multiple of `multiple` and divides dim.

    Falls back to the full dim (always a legal block size)."""
    if dim <= preferred:
        return dim
    t = (preferred // multiple) * multiple
    while t >= multiple:
        if dim % t == 0:
            return t
        t -= multiple
    return dim


def _compiler_params(semantics, needed_bytes):
    # Raise the scoped-VMEM limit above the default only when the chosen tiles need it.
    # NOTE: on v7x (64 MiB physical VMEM per TC) re-derive the tile constants so that
    # `needed_bytes` stays well under ~48 MiB.
    limit = None
    if needed_bytes > (32 << 20):
        limit = int(needed_bytes) + (4 << 20)
    return pltpu.CompilerParams(dimension_semantics=semantics,
                                vmem_limit_bytes=limit)


# ----------------------------------------------------------------------------- kernels

def _matmul_kernel(*refs, activation, has_residual):
    if has_residual:
        x_ref, w_ref, b_ref, r_ref, o_ref, acc_ref = refs
    else:
        x_ref, w_ref, b_ref, o_ref, acc_ref = refs
        r_ref = None

    @pl.when(pl.program_id(2) == 0)
    def _():
        acc_ref[...] = jnp.zeros_like(acc_ref)

    # MXU matmul in the storage dtype (bf16 stays bf16), f32 accumulation.
    acc_ref[...] += jnp.dot(x_ref[...], w_ref[...],
                            preferred_element_type=jnp.float32)

    @pl.when(pl.program_id(2) == pl.num_programs(2) - 1)
    def _():
        y = acc_ref[...] + b_ref[...].astype(jnp.float32)
        if has_residual:
            y = y + r_ref[...].astype(jnp.float32)
        if activation == "gelu":
            # TODO(synk): exact erf GELU if lax.erf lowers on this Mosaic version;
            # using the tanh approximation ("gelu_new") here.
            c = math.sqrt(2.0 / math.pi)
            y = 0.5 * y * (1.0 + jnp.tanh(c * (y + 0.044715 * y * y * y)))
        o_ref[...] = y.astype(o_ref.dtype)


def _flash_attn_kernel(q_ref, k_ref, v_ref, mask_ref, o_ref,
                       m_sc, l_sc, acc_sc, *, scale):
    ki = pl.program_id(3)

    @pl.when(ki == 0)
    def _():
        m_sc[...] = jnp.full_like(m_sc, -jnp.inf)
        l_sc[...] = jnp.zeros_like(l_sc)
        acc_sc[...] = jnp.zeros_like(acc_sc)

    q = q_ref[0, 0]                      # (tq, Dh)
    k = k_ref[0, 0]                      # (tk, Dh)
    v = v_ref[0, 0]                      # (tk, Dh)

    # Q K^T without an explicit transpose of K (contract the last axes).
    s = jax.lax.dot_general(q, k, (((1,), (1,)), ((), ())),
                            preferred_element_type=jnp.float32)
    s = s * scale + mask_ref[0].astype(jnp.float32)       # (tq, tk) + (1, tk)

    m_prev = m_sc[...]
    m_new = jnp.maximum(m_prev, jnp.max(s, axis=-1, keepdims=True))
    alpha = jnp.exp(m_prev - m_new)
    p = jnp.exp(s - m_new)

    l_sc[...] = alpha * l_sc[...] + jnp.sum(p, axis=-1, keepdims=True)
    acc_sc[...] = alpha * acc_sc[...] + jax.lax.dot_general(
        p.astype(v.dtype), v, (((1,), (0,)), ((), ())),
        preferred_element_type=jnp.float32)
    m_sc[...] = m_new

    @pl.when(ki == pl.num_programs(3) - 1)
    def _():
        o_ref[0, 0] = (acc_sc[...] * pl.reciprocal(l_sc[...], approx=True)
                       ).astype(o_ref.dtype)


def _layernorm_kernel(x_ref, g_ref, b_ref, o_ref, *, eps):
    x = x_ref[...].astype(jnp.float32)
    mu = jnp.mean(x, axis=-1, keepdims=True)
    var = jnp.mean(jnp.square(x - mu), axis=-1, keepdims=True)
    y = (x - mu) * jax.lax.rsqrt(var + eps)
    o_ref[...] = (y * g_ref[...].astype(jnp.float32)
                  + b_ref[...].astype(jnp.float32)).astype(o_ref.dtype)


# ----------------------------------------------------------------------------- wrappers

def linear(x2d, w, b, residual=None, activation=None, tm=256, tn=256, tk=512):
    """y = x2d @ w + b (+ residual) (+ activation), tiled with a K-loop accumulator."""
    M, K = x2d.shape
    N = w.shape[1]
    tm = _choose_tile(M, tm, _SUBLANE)
    tn = _choose_tile(N, tn, _LANE)
    tk = _choose_tile(K, tk, _LANE)
    b2 = b.reshape(1, N)

    has_residual = residual is not None
    kernel = functools.partial(_matmul_kernel, activation=activation,
                               has_residual=has_residual)

    in_specs = [
        pl.BlockSpec((tm, tk), lambda i, j, k: (i, k)),
        pl.BlockSpec((tk, tn), lambda i, j, k: (k, j)),
        pl.BlockSpec((1, tn), lambda i, j, k: (0, j)),
    ]
    inputs = [x2d, w, b2]
    if has_residual:
        in_specs.append(pl.BlockSpec((tm, tn), lambda i, j, k: (i, j)))
        inputs.append(residual)

    dsz = jnp.dtype(x2d.dtype).itemsize
    needed = 2 * (tm * tk * dsz + tk * tn * dsz + tn * dsz
                  + (tm * tn * dsz if has_residual else 0)
                  + tm * tn * dsz) + tm * tn * 4

    return pl.pallas_call(
        kernel,
        out_shape=jax.ShapeDtypeStruct((M, N), x2d.dtype),
        grid=(M // tm, N // tn, K // tk),
        in_specs=in_specs,
        out_specs=pl.BlockSpec((tm, tn), lambda i, j, k: (i, j)),
        scratch_shapes=[pltpu.VMEM((tm, tn), jnp.float32)],
        compiler_params=_compiler_params(
            ("parallel", "parallel", "arbitrary"), needed),
    )(*inputs)


def attention_core(q, k, v, add_mask, tq=256, tk=512):
    """q,k,v: [B, nH, S, Dh]; add_mask: [B, 1, S] additive mask (0 / -1e4)."""
    B, H, S, D = q.shape
    scale = 1.0 / math.sqrt(D)
    tq = _choose_tile(S, tq, _SUBLANE)
    tk = _choose_tile(S, tk, _LANE)       # also the lane dim of the mask block

    dsz = jnp.dtype(q.dtype).itemsize
    needed = 2 * (tq * D * dsz + 2 * tk * D * dsz + tk * 4 + tq * D * dsz) \
        + (2 * tq + tq * D) * 4

    # TODO(synk): pack two heads per grid step when Dh=64 so the minor dim is 128
    # (lane-dense output stores, better MXU fill on v6e/v7x).
    kernel = functools.partial(_flash_attn_kernel, scale=scale)
    return pl.pallas_call(
        kernel,
        out_shape=jax.ShapeDtypeStruct((B, H, S, D), q.dtype),
        grid=(B, H, S // tq, S // tk),
        in_specs=[
            pl.BlockSpec((1, 1, tq, D), lambda b, h, qi, ki: (b, h, qi, 0)),
            pl.BlockSpec((1, 1, tk, D), lambda b, h, qi, ki: (b, h, ki, 0)),
            pl.BlockSpec((1, 1, tk, D), lambda b, h, qi, ki: (b, h, ki, 0)),
            pl.BlockSpec((1, 1, tk), lambda b, h, qi, ki: (b, 0, ki)),
        ],
        out_specs=pl.BlockSpec((1, 1, tq, D), lambda b, h, qi, ki: (b, h, qi, 0)),
        scratch_shapes=[pltpu.VMEM((tq, 1), jnp.float32),
                        pltpu.VMEM((tq, 1), jnp.float32),
                        pltpu.VMEM((tq, D), jnp.float32)],
        compiler_params=_compiler_params(
            ("parallel", "parallel", "parallel", "arbitrary"), needed),
    )(q, k, v, add_mask)


def layernorm(x2d, gamma, beta, eps, tm=512):
    """Row-tiled LayerNorm over the last dim (residual already fused upstream)."""
    M, N = x2d.shape
    tm = _choose_tile(M, tm, _SUBLANE)
    g2 = gamma.reshape(1, N)
    b2 = beta.reshape(1, N)
    dsz = jnp.dtype(x2d.dtype).itemsize
    needed = 2 * (2 * tm * N * dsz + 2 * N * dsz)
    return pl.pallas_call(
        functools.partial(_layernorm_kernel, eps=eps),
        out_shape=jax.ShapeDtypeStruct((M, N), x2d.dtype),
        grid=(M // tm,),
        in_specs=[pl.BlockSpec((tm, N), lambda i: (i, 0)),
                  pl.BlockSpec((1, N), lambda i: (0, 0)),
                  pl.BlockSpec((1, N), lambda i: (0, 0))],
        out_specs=pl.BlockSpec((tm, N), lambda i: (i, 0)),
        compiler_params=_compiler_params(("parallel",), needed),
    )(x2d, g2, b2)


# ----------------------------------------------------------------------------- model

def init_layer_params(key, hidden, intermediate, dtype=jnp.float32):
    ks = jax.random.split(key, 4)
    std = 0.02
    return {
        # fused QKV projection: columns are [Q | K | V], each nH*Dh wide
        "w_qkv": (jax.random.normal(ks[0], (hidden, 3 * hidden), jnp.float32) * std).astype(dtype),
        "b_qkv": jnp.zeros((3 * hidden,), dtype),
        "w_o": (jax.random.normal(ks[1], (hidden, hidden), jnp.float32) * std).astype(dtype),
        "b_o": jnp.zeros((hidden,), dtype),
        "ln1_g": jnp.ones((hidden,), dtype),
        "ln1_b": jnp.zeros((hidden,), dtype),
        "w_i": (jax.random.normal(ks[2], (hidden, intermediate), jnp.float32) * std).astype(dtype),
        "b_i": jnp.zeros((intermediate,), dtype),
        "w_o2": (jax.random.normal(ks[3], (intermediate, hidden), jnp.float32) * std).astype(dtype),
        "b_o2": jnp.zeros((hidden,), dtype),
        "ln2_g": jnp.ones((hidden,), dtype),
        "ln2_b": jnp.zeros((hidden,), dtype),
    }


def transformer_layer(hidden_states, add_mask, params, num_heads, eps):
    B, S, H = hidden_states.shape
    Dh = H // num_heads
    x2d = hidden_states.reshape(B * S, H)

    # --- BertSelfAttention: fused QKV projection (one HBM pass over x2d) ---
    qkv = linear(x2d, params["w_qkv"], params["b_qkv"])          # [B*S, 3H]

    # one transpose to head-major layout (3, B, nH, S, Dh); slicing axis 0 is free.
    # TODO(synk): index heads straight out of the [B*S, 3H] slab via BlockSpec column
    # offsets (needs Dh-multiple-of-128 head packing) to drop this HBM transpose.
    qkv = qkv.reshape(B, S, 3, num_heads, Dh).transpose(2, 0, 3, 1, 4)
    q, k, v = qkv[0], qkv[1], qkv[2]

    ctx = attention_core(q, k, v, add_mask)                      # [B, nH, S, Dh]
    ctx2d = ctx.transpose(0, 2, 1, 3).reshape(B * S, H)

    # --- BertSelfOutput: Linear (+bias +residual fused) -> (dropout id) -> LayerNorm ---
    attn_out = linear(ctx2d, params["w_o"], params["b_o"], residual=x2d)
    attn_out = layernorm(attn_out, params["ln1_g"], params["ln1_b"], eps)

    # --- BertIntermediate: Linear + GELU (fused epilogue) ---
    inter = linear(attn_out, params["w_i"], params["b_i"], activation="gelu")

    # --- BertOutput: Linear (+bias +residual fused) -> (dropout id) -> LayerNorm ---
    out = linear(inter, params["w_o2"], params["b_o2"], residual=attn_out)
    out = layernorm(out, params["ln2_g"], params["ln2_b"], eps)

    return out.reshape(B, S, H)


def transformer_encoder(hidden_states, attention_mask, layer_params, num_heads,
                        eps=1e-12, head_mask=None,
                        output_hidden_states=False, output_attentions=False):
    """attention_mask: binary [B, S] (1 = keep)."""
    B, S, _ = hidden_states.shape
    # BERT-style additive extended mask shaped [B, 1, S] for the flash kernel.
    add_mask = (1.0 - attention_mask.astype(jnp.float32)).reshape(B, 1, S) * -10000.0

    if output_attentions:
        # TODO(synk): returning attention probs needs a non-flash kernel that
        # materializes the S x S matrix per head.
        raise NotImplementedError("output_attentions is not supported")

    all_hidden_states = ()
    for i, params in enumerate(layer_params):
        if head_mask is not None and head_mask[i] is not None:
            # TODO(synk): per-head mask would be fused as a scale on the attention
            # probabilities inside the flash kernel.
            raise NotImplementedError("non-None head_mask is not supported")
        if output_hidden_states:
            all_hidden_states = all_hidden_states + (hidden_states,)
        hidden_states = transformer_layer(hidden_states, add_mask, params,
                                          num_heads, eps)
    if output_hidden_states:
        all_hidden_states = all_hidden_states + (hidden_states,)

    outputs = (hidden_states,)
    if output_hidden_states:
        outputs = outputs + (all_hidden_states,)
    return outputs


# ----------------------------------------------------------------------------- main

if __name__ == "__main__":
    B, S, H = 2, 8, 32
    num_heads = 4
    intermediate = 64
    num_layers = 2

    key = jax.random.PRNGKey(0)
    k_in, k_params = jax.random.split(key)
    # f32 demo; pass bf16 hidden_states / params for the bf16-MXU path (no upcast in-kernel).
    hidden_states = jax.random.normal(k_in, (B, S, H), jnp.float32)

    # binary attention mask (last two tokens of batch 1 padded out)
    attention_mask = jnp.ones((B, S), jnp.float32).at[1, -2:].set(0.0)

    layer_keys = jax.random.split(k_params, num_layers)
    layer_params = [init_layer_params(layer_keys[i], H, intermediate)
                    for i in range(num_layers)]

    head_mask = [None] * num_layers
    outputs = transformer_encoder(hidden_states, attention_mask, layer_params,
                                  num_heads, head_mask=head_mask)
    out = jax.block_until_ready(outputs[0])
    assert out.shape == (B, S, H)
    assert bool(jnp.all(jnp.isfinite(out)))
    print("KERNEL_OK")
</pallas_src>

<mosaic_0001>
module attributes {stable_mosaic.version = 11 : i64} {
  func.func @_matmul_kernel(%arg0: i32, %arg1: i32, %arg2: i32, %arg3: memref<16x32xf32, #tpu.memory_space<vmem>>, %arg4: memref<32x96xf32, #tpu.memory_space<vmem>>, %arg5: memref<1x96xf32, #tpu.memory_space<vmem>>, %arg6: memref<16x96xf32, #tpu.memory_space<vmem>>, %arg7: memref<16x96xf32, #tpu.memory_space<vmem>>) attributes {dimension_semantics = [#tpu.dimension_semantics<parallel>, #tpu.dimension_semantics<parallel>, #tpu.dimension_semantics<arbitrary>], iteration_bounds = array<i64: 1, 1, 1>, scalar_prefetch = 0 : i64, scratch_operands = 1 : i64, tpu.core_type = #tpu.core_type<tc>, window_params = [{transform_indices = @transform_0, window_bounds = array<i64: 16, 32>}, {transform_indices = @transform_1, window_bounds = array<i64: 32, 96>}, {transform_indices = @transform_2, window_bounds = array<i64: 1, 96>}, {transform_indices = @transform_3, window_bounds = array<i64: 16, 96>}]} {
    %c0_i32 = arith.constant 0 : i32
    %0 = arith.cmpi eq, %arg2, %c0_i32 : i32
    %1 = arith.extui %0 : i1 to i32
    %c0_i32_0 = arith.constant 0 : i32
    %2 = arith.cmpi ne, %1, %c0_i32_0 : i32
    scf.if %2 {
      %cst_10 = arith.constant 0.000000e+00 : f32
      %12 = vector.broadcast %cst_10 : f32 to vector<16x96xf32>
      %c0_11 = arith.constant 0 : index
      %c0_12 = arith.constant 0 : index
      %13 = vector.load %arg7[%c0_11, %c0_12] : memref<16x96xf32, #tpu.memory_space<vmem>>, vector<16x96xf32>
      tpu.vector_store %arg7[%c0_11, %c0_12], %12 {strides = array<i32>} : memref<16x96xf32, #tpu.memory_space<vmem>>, vector<16x96xf32>,
    } else {
    }
    %c0 = arith.constant 0 : index
    %c0_1 = arith.constant 0 : index
    %3 = vector.load %arg7[%c0, %c0_1] : memref<16x96xf32, #tpu.memory_space<vmem>>, vector<16x96xf32>
    %c0_2 = arith.constant 0 : index
    %c0_3 = arith.constant 0 : index
    %4 = vector.load %arg3[%c0_2, %c0_3] : memref<16x32xf32, #tpu.memory_space<vmem>>, vector<16x32xf32>
    %c0_4 = arith.constant 0 : index
    %c0_5 = arith.constant 0 : index
    %5 = vector.load %arg4[%c0_4, %c0_5] : memref<32x96xf32, #tpu.memory_space<vmem>>, vector<32x96xf32>
    %cst = arith.constant dense<0.000000e+00> : vector<16x96xf32>
    %6 = tpu.matmul %4, %5, %cst {dimension_numbers = #tpu.dot_dimension_numbers<[1], [0], [0], [1], [0, 0, 1, 1], [], []>} : vector<16x32xf32>, vector<32x96xf32>, vector<16x96xf32> -> vector<16x96xf32>
    %7 = arith.addf %3, %6 : vector<16x96xf32>
    %c0_6 = arith.constant 0 : index
    %c0_7 = arith.constant 0 : index
    %8 = vector.load %arg7[%c0_6, %c0_7] : memref<16x96xf32, #tpu.memory_space<vmem>>, vector<16x96xf32>
    tpu.vector_store %arg7[%c0_6, %c0_7], %7 {strides = array<i32>} : memref<16x96xf32, #tpu.memory_space<vmem>>, vector<16x96xf32>,
    %c0_i32_8 = arith.constant 0 : i32
    %9 = arith.cmpi eq, %arg2, %c0_i32_8 : i32
    %10 = arith.extui %9 : i1 to i32
    %c0_i32_9 = arith.constant 0 : i32
    %11 = arith.cmpi ne, %10, %c0_i32_9 : i32
    scf.if %11 {
      %c0_10 = arith.constant 0 : index
      %c0_11 = arith.constant 0 : index
      %12 = vector.load %arg7[%c0_10, %c0_11] : memref<16x96xf32, #tpu.memory_space<vmem>>, vector<16x96xf32>
      %c0_12 = arith.constant 0 : index
      %c0_13 = arith.constant 0 : index
      %13 = vector.load %arg5[%c0_12, %c0_13] : memref<1x96xf32, #tpu.memory_space<vmem>>, vector<1x96xf32>
      %14 = vector.broadcast %13 : vector<1x96xf32> to vector<16x96xf32>
      %15 = arith.addf %12, %14 : vector<16x96xf32>
      %c0_14 = arith.constant 0 : index
      %c0_15 = arith.constant 0 : index
      %16 = vector.load %arg6[%c0_14, %c0_15] : memref<16x96xf32, #tpu.memory_space<vmem>>, vector<16x96xf32>
      tpu.vector_store %arg6[%c0_14, %c0_15], %15 {strides = array<i32>} : memref<16x96xf32, #tpu.memory_space<vmem>>, vector<16x96xf32>,
    } else {
    }
    return
  }
  func.func @transform_0(%arg0: i32, %arg1: i32, %arg2: i32) -> (i32, i32) {
    %c0_i32 = arith.constant 0 : i32
    return %arg0, %arg2 : i32, i32
  }
  func.func @transform_1(%arg0: i32, %arg1: i32, %arg2: i32) -> (i32, i32) {
    %c0_i32 = arith.constant 0 : i32
    return %arg2, %arg1 : i32, i32
  }
  func.func @transform_2(%arg0: i32, %arg1: i32, %arg2: i32) -> (i32, i32) {
    %c0_i32 = arith.constant 0 : i32
    %c0_i32_0 = arith.constant 0 : i32
    return %c0_i32, %arg1 : i32, i32
  }
  func.func @transform_3(%arg0: i32, %arg1: i32, %arg2: i32) -> (i32, i32) {
    %c0_i32 = arith.constant 0 : i32
    return %arg0, %arg1 : i32, i32
  }
}

</mosaic_0001>

<llo_original>
// kernel: tpu_custom_call.1
$region0: #{tpu_custom_call.1}
  #allocation0 [shape = 'u32[]', space=smem, size = 0x4, offset = 0x4, fixed_abs, tag = 'smem constant byte address 0x4 - core index']
  #allocation1 [shape = 'u32[144,128]{1,0:T(1,128)}', space=vmem, size = 0x12000, scoped, tag = 'internal scratch']
  #allocation2 [shape = 'f32[16,96]{1,0:T(8,128)}', space=vmem, size = 0x2000, scoped, tag = 'scratch operand']
  %s0 = inlined_call_operand.hbm [shape: f32[16,32], index: 0, kind: input, shape index: {}]
  %s1 = inlined_call_operand.hbm [shape: f32[32,96], index: 1, kind: input, shape index: {}]
  %s2 = inlined_call_operand.vmem [shape: f32[1,96], index: 2, kind: input, shape index: {}]
  %s3 = inlined_call_operand.hbm [shape: f32[16,96], index: 3, kind: output, shape index: {}]
  %s4 = sld [smem:[#allocation0]]
  $region38: #{tpu_custom_call.1} parent=0
    _
  %s6 = ssub.s32 1, %s4
  %s7 = scalar_select 0, %s6, %s4
  $region1: #{tpu_custom_call.1} parent=0
    #allocation3 [shape = 'u8[8192]{0}', space=vmem, size = 0x2000, scoped, tag = 'input window, operand 0, single buffered']
    #allocation4 [shape = 's32[1]{0}', space=sflag, size = 0x4, scoped, tag = 'scoped memory for tpu_custom_call.1']
    #allocation5 [shape = 's32[1]{0}', space=sflag, size = 0x4, scoped, tag = 'scoped memory for tpu_custom_call.1']
    #allocation6 [shape = 'u8[16384]{0}', space=vmem, size = 0x4000, scoped, tag = 'input window, operand 1, single buffered']
    #allocation7 [shape = 's32[1]{0}', space=sflag, size = 0x4, scoped, tag = 'scoped memory for tpu_custom_call.1']
    #allocation8 [shape = 'u8[8192]{0}', space=vmem, size = 0x2000, scoped, tag = 'output window, operand 0, single buffered']
    %8 = vsyncpa [#allocation4], 0
    %9 = vsyncpa [#allocation7], 0
    %10 = vsyncpa [#allocation5], 0
    // Predicated region
    $region2: #{tpu_custom_call.1} parent=1 // pred_check
      _
    $region3: #{tpu_custom_call.1} parent=1 // pred_check_branch
      %12 = sbr.rel (0) target = $region5
    $region4: #{tpu_custom_call.1} parent=1 // pred_region
      %s14 = ssub.s32 256, 256
      %15 = vsyncadd [#allocation4], %s14
      %s16 = sshll.u32 [#allocation3], 4
      %s17 = int_to_ptr.vmem [resolvable:$true] %s16
      %22 = dma.hbm_to_vmem [thread:$0]  %s0, 256, %s17, [#allocation4], 128, 128, 8
    $region5: #{tpu_custom_call.1} parent=1 // pred_fallthru
      _
    // Predicated region
    $region6: #{tpu_custom_call.1} parent=1 // pred_check
      _
    $region7: #{tpu_custom_call.1} parent=1 // pred_check_branch
      %24 = sbr.rel (0) target = $region9
    $region8: #{tpu_custom_call.1} parent=1 // pred_region
      %s26 = ssub.s32 512, 512
      %27 = vsyncadd [#allocation7], %s26
      %s28 = sshll.u32 [#allocation6], 4
      %s29 = int_to_ptr.vmem [resolvable:$true] %s28
      %34 = dma.hbm_to_vmem [thread:$0]  %s1, 512, %s29, [#allocation7], 128, 128, 8
    $region9: #{tpu_custom_call.1} parent=1 // pred_fallthru
      _
    // Predicated region
    $region10: #{tpu_custom_call.1} parent=1 // pred_check
      _
    $region11: #{tpu_custom_call.1} parent=1 // pred_check_branch
      %36 = sbr.rel (0) target = $region13
    $region12: #{tpu_custom_call.1} parent=1 // pred_region
      _
    $region13: #{tpu_custom_call.1} parent=1 // pred_fallthru
      _
    // Predicated region
    $region14: #{tpu_custom_call.1} parent=1 // pred_check
      _
    $region15: #{tpu_custom_call.1} parent=1 // pred_check_branch
      %38 = sbr.rel (0) target = $region17
    $region16: #{tpu_custom_call.1} parent=1 // pred_region
      %39 = dma.done [#allocation4], 256
    $region17: #{tpu_custom_call.1} parent=1 // pred_fallthru
      _
    // Predicated region
    $region18: #{tpu_custom_call.1} parent=1 // pred_check
      _
    $region19: #{tpu_custom_call.1} parent=1 // pred_check_branch
      %41 = sbr.rel (0) target = $region21
    $region20: #{tpu_custom_call.1} parent=1 // pred_region
      %42 = dma.done [#allocation7], 512
    $region21: #{tpu_custom_call.1} parent=1 // pred_fallthru
      _
    %p43 = scmp.eq.s32.totalorder 0, 0
    // Predicated region
    $region22: #{tpu_custom_call.1} parent=1 // pred_check
      %p44 = pneg %p43
    $region23: #{tpu_custom_call.1} parent=1 // pred_check_branch
      %46 = sbr.rel (%p44) target = $region25
    $region24: #{tpu_custom_call.1} parent=1 // pred_region
      %vm47 = vcmask 785408
      %48 = vst.msk [vmem:[#allocation2] sm:$0xff] %vm47, 0.0
      %49 = vst.msk [vmem:[#allocation2 + $0x8] sm:$0xff] %vm47, 0.0
    $region25: #{tpu_custom_call.1} parent=1 // pred_fallthru
      _
    %v50 = vld [vmem:[#allocation2] sm:$0xff]
    %v51 = vld [vmem:[#allocation2 + $0x8] sm:$0xff]
    %v52 = vld [vmem:[#allocation3] sm:$0xff]
    %v53 = vld [vmem:[#allocation3 + $0x8] sm:$0xff]
    %v54 = vld [vmem:[#allocation6] sm:$0xff]
    %v55 = vld [vmem:[#allocation6 + $0x8] sm:$0xff]
    %v56 = vld [vmem:[#allocation6 + $0x10] sm:$0xff]
    %v57 = vld [vmem:[#allocation6 + $0x18] sm:$0xff]
    %vm58 = vcmask 261120
    %v60 = vsel %vm58, %v52, 0
    %v63 = vsel %vm58, %v53, 0
    %65 = vmatprep.subr.mxu0 0.0
    %66 = vmatpush1.msra.mxu0 %v54
    %67 = vmatprep.subr.mxu0 0.0
    %68 = vmatpush1.msra.mxu0 %v55
    %69 = vmatprep.subr.mxu0 0.0
    %70 = vmatpush1.msra.mxu0 %v56
    %71 = vmatprep.subr.mxu0 0.0
    %72 = vmatpush1.msra.mxu0 %v57
    %73 = vmatprep.subr.mxu0 0.0
    %74 = vmatpush1.msra.mxu0 0.0
    %75 = vmatprep.subr.mxu0 0.0
    %76 = vmatpush1.msra.mxu0 0.0
    %77 = vmatprep.subr.mxu0 0.0
    %78 = vmatpush1.msra.mxu0 0.0
    %79 = vmatprep.subr.mxu0 0.0
    %80 = vmatpush1.msra.mxu0 0.0
    %81 = vmatprep.subr.mxu0 0.0
    %82 = vmatpush1.msra.mxu0 0.0
    %83 = vmatprep.subr.mxu0 0.0
    %84 = vmatpush1.msra.mxu0 0.0
    %85 = vmatprep.subr.mxu0 0.0
    %86 = vmatpush1.msra.mxu0 0.0
    %87 = vmatprep.subr.mxu0 0.0
    %88 = vmatpush1.msra.mxu0 0.0
    %89 = vmatprep.subr.mxu0 0.0
    %90 = vmatpush1.msra.mxu0 0.0
    %91 = vmatprep.subr.mxu0 0.0
    %92 = vmatpush1.msra.mxu0 0.0
    %93 = vmatprep.subr.mxu0 0.0
    %94 = vmatpush1.msra.mxu0 0.0
    %95 = vmatprep.subr.mxu0 0.0
    %96 = vmatpush1.msra.mxu0 0.0
    %97 = vmatprep.subr.mxu0 0.0
    %98 = vmatpush1.msra.mxu0 0.0
    %99 = vmatprep.subr.mxu0 0.0
    %100 = vmatpush1.msra.mxu0 0.0
    %101 = vmatprep.subr.mxu0 0.0
    %102 = vmatpush1.msra.mxu0 0.0
    %103 = vmatprep.subr.mxu0 0.0
    %104 = vmatpush1.msra.mxu0 0.0
    %105 = vmatprep.subr.mxu0 0.0
    %106 = vmatpush1.msra.mxu0 0.0
    %107 = vmatprep.subr.mxu0 0.0
    %108 = vmatpush1.msra.mxu0 0.0
    %109 = vmatprep.subr.mxu0 0.0
    %110 = vmatpush1.msra.mxu0 0.0
    %111 = vmatprep.subr.mxu0 0.0
    %112 = vmatpush1.msra.mxu0 0.0
    %113 = vmatprep.subr.mxu0 0.0
    %114 = vmatpush1.msra.mxu0 0.0
    %115 = vmatprep.subr.mxu0 0.0
    %116 = vmatpush1.msra.mxu0 0.0
    %117 = vmatprep.subr.mxu0 0.0
    %118 = vmatpush1.msra.mxu0 0.0
    %119 = vmatprep.subr.mxu0 0.0
    %120 = vmatpush1.msra.mxu0 0.0
    %121 = vmatprep.subr.mxu0 0.0
    %122 = vmatpush1.msra.mxu0 0.0
    %123 = vmatprep.subr.mxu0 0.0
    %124 = vmatpush1.msra.mxu0 0.0
    %125 = vmatprep.subr.mxu0 0.0
    %126 = vmatpush1.msra.mxu0 0.0
    %127 = vmatprep.subr.mxu0 0.0
    %128 = vmatpush1.msra.mxu0 0.0
    %129 = vmatprep.mubr.f32.mxu0 0.0
    %130 = vmatmul.mubr.f32.gmra.mrb[0].mxu0 %v60
    %v131 = vpop.f32.mrb[0].mxu0
    %v132 = vadd.f32 0.0, %v131
    %v133 = vpop.f32.mrb[0].mxu0
    %134 = vmatprep.mubr.f32.mxu0 0.0
    %135 = vmatmul.mubr.f32.gmra.mrb[0].mxu0 %v63
    %v136 = vpop.f32.mrb[0].mxu0
    %v137 = vadd.f32 0.0, %v136
    %v138 = vpop.f32.mrb[0].mxu0
    %139 = vdwg.mxu0
    %v140 = vadd.f32 %v50, %v132
    %v141 = vadd.f32 %v51, %v137
    %vm142 = vcmask 785408
    %143 = vst.msk [vmem:[#allocation2] sm:$0xff] %vm142, %v140
    %144 = vst.msk [vmem:[#allocation2 + $0x8] sm:$0xff] %vm142, %v141
    // Predicated region
    $region26: #{tpu_custom_call.1} parent=1 // pred_check
      %p145 = pneg %p43
    $region27: #{tpu_custom_call.1} parent=1 // pred_check_branch
      %147 = sbr.rel (%p145) target = $region29
    $region28: #{tpu_custom_call.1} parent=1 // pred_region
      %v148 = vld [vmem:[#allocation2] sm:$0xff]
      %v149 = vld [vmem:[#allocation2 + $0x8] sm:$0xff]
      %v150 = vld [vmem:[%s2] sm:$0x1]
      %v152 = vlaneseq
      %v153 = vshrl.u32 %v152, 7
      %v154 = vsub.s32 0, %v153
      %v155 = vrot.slane %v150, %v154
      %v157 = vadd.f32 %v148, %v155
      %v158 = vadd.f32 %v149, %v155
      %159 = vst.msk [vmem:[#allocation8] sm:$0xff] %vm142, %v157
      %160 = vst.msk [vmem:[#allocation8 + $0x8] sm:$0xff] %vm142, %v158
    $region29: #{tpu_custom_call.1} parent=1 // pred_fallthru
      _
    // Predicated region
    $region30: #{tpu_custom_call.1} parent=1 // pred_check
      _
    $region31: #{tpu_custom_call.1} parent=1 // pred_check_branch
      %162 = sbr.rel (0) target = $region33
    $region32: #{tpu_custom_call.1} parent=1 // pred_region
      %s164 = ssub.s32 256, 256
      %165 = vsyncadd [#allocation5], %s164
      %s166 = sshll.u32 [#allocation8], 4
      %s167 = int_to_ptr.vmem [resolvable:$true] %s166
      %172 = dma.vmem_to_hbm [thread:$0]  %s167, 256, %s3, [#allocation5], 128, 128, 8
    $region33: #{tpu_custom_call.1} parent=1 // pred_fallthru
      _
    // Predicated region
    $region34: #{tpu_custom_call.1} parent=1 // pred_check
      _
    $region35: #{tpu_custom_call.1} parent=1 // pred_check_branch
      %174 = sbr.rel (0) target = $region37
    $region36: #{tpu_custom_call.1} parent=1 // pred_region
      %175 = dma.done [#allocation5], 256
    $region37: #{tpu_custom_call.1} parent=1 // pred_fallthru
      _
    %176 = vsyncpa [#allocation4], 1
    %177 = vsyncpa [#allocation7], 1
    %178 = vsyncpa [#allocation5], 1

</llo_original>
